<compile_context>
chip_gen: v6e
topology: v6e:2x2x1
jax: 0.10.0
libtpu: 0.0.40
codegen_flags: <defaults>
</compile_context>

<pallas_src>
import functools
import jax
import jax.numpy as jnp
from jax import lax
from jax.experimental import pallas as pl
from jax.experimental.pallas import tpu as pltpu


# ---------------------------------------------------------------------------
# Kernel: fused reparameterised 3x3 conv + bias + identity-BN branch + ReLU
# ---------------------------------------------------------------------------
def _repvgg_kernel(H, Wp, x_ref, w_ref, b_ref, sid_ref, o_ref):
    # x_ref  : (1, C1, L)    bf16, L = (H+2)*Wp + 2 (zero-padded + 1-elem guards)
    # w_ref  : (9, C2, C1)   bf16, stacked taps of fused 3x3 kernel (dense + 1x1)
    # b_ref  : (C2, 1)       f32,  fused bias of all three branches
    # sid_ref: (C2, 1)       f32,  per-channel scale of the identity-BN branch
    # o_ref  : (1, C2, H*Wp) f32
    HWp = H * Wp
    x = x_ref[0]                                        # (C1, L) bf16

    # 3x3 conv as 9 statically shifted matmuls, f32 accumulation on the MXU.
    parts = []
    for k in range(9):                                  # static unroll (9 taps)
        s = (k // 3) * Wp + (k % 3)                     # static lane offset
        parts.append(jnp.dot(w_ref[k], x[:, s:s + HWp],
                             preferred_element_type=jnp.float32))
    # balanced pairwise tree reduction (shorter dependent-add chain than serial)
    while len(parts) > 1:
        parts = [parts[i] + parts[i + 1] if i + 1 < len(parts) else parts[i]
                 for i in range(0, len(parts), 2)]
    acc = parts[0]                                      # (C2, HWp) f32

    # Identity-BN branch (x * gamma/sqrt(var+eps)) in f32 on the VPU, plus bias.
    center = x[:, Wp + 1:Wp + 1 + HWp].astype(jnp.float32)
    y = acc + (b_ref[...] + sid_ref[...] * center)
    o_ref[0] = jnp.maximum(y, 0.0)                      # nonlinearity = ReLU


# ---------------------------------------------------------------------------
# Wrapper
# ---------------------------------------------------------------------------
def repvgg_block_pallas(x_nchw, p, eps=1e-5):
    B, C1, H, W = x_nchw.shape
    C2 = p['w3'].shape[0]
    assert C1 == C2, "identity branch requires in_channels == out_channels, stride==1"
    Hp, Wp = H + 2, W + 2
    HWp = H * Wp
    L = Hp * Wp + 2
    f32, bf16 = jnp.float32, jnp.bfloat16

    # ---- fold eval-mode BN into each conv branch, then merge dense + 1x1 ----
    s3 = p['g3'] / jnp.sqrt(p['v3'] + eps)
    w3 = p['w3'] * s3[:, None, None, None]                  # (C2, C1, 3, 3)
    b3 = p['b3'] - p['m3'] * s3

    s1 = p['g1'] / jnp.sqrt(p['v1'] + eps)
    w1 = p['w1'][:, :, 0, 0] * s1[:, None]                  # (C2, C1)
    b1 = p['b1'] - p['m1'] * s1

    sid = p['gid'] / jnp.sqrt(p['vid'] + eps)               # (C1,)
    bid = p['bid'] - p['mid'] * sid

    w_eq = w3.at[:, :, 1, 1].add(w1)                        # 1x1 -> center tap
    b_eq = (b3 + b1 + bid).astype(f32).reshape(C2, 1)
    # taps stacked as (9, C2, C1) with k = dy*3 + dx, cast to bf16 for the MXU
    w_stack = jnp.transpose(w_eq, (2, 3, 0, 1)).reshape(9, C2, C1).astype(bf16)
    sid_col = sid.astype(f32).reshape(C2, 1)

    # ---- activations: NCHW -> zero-pad spatial, flatten, 1-elem guards, bf16 ----
    xp = jnp.pad(x_nchw, ((0, 0), (0, 0), (1, 1), (1, 1)))   # (B, C1, Hp, Wp)
    xb = jnp.pad(xp.reshape(B, C1, Hp * Wp),
                 ((0, 0), (0, 0), (1, 1))).astype(bf16)      # (B, C1, L)

    # ---- VMEM budget / scheduling hints ----
    blk_bytes = 2 * (C1 * L * 2 + C2 * HWp * 4) + 9 * C2 * C1 * 2 + 2 * C2 * 4
    vmem_limit = int(min(max(8 * 1024 * 1024, 4 * blk_bytes), 48 * 1024 * 1024))
    cost = pl.CostEstimate(
        flops=2 * B * 9 * C1 * C2 * HWp + 4 * B * C2 * HWp,
        transcendentals=0,
        bytes_accessed=B * C1 * L * 2 + 9 * C2 * C1 * 2 + B * C2 * HWp * 4)

    out = pl.pallas_call(
        functools.partial(_repvgg_kernel, H, Wp),
        grid=(B,),
        in_specs=[
            pl.BlockSpec((1, C1, L), lambda b: (b, 0, 0)),
            pl.BlockSpec((9, C2, C1), lambda b: (0, 0, 0)),
            pl.BlockSpec((C2, 1), lambda b: (0, 0)),
            pl.BlockSpec((C2, 1), lambda b: (0, 0)),
        ],
        out_specs=pl.BlockSpec((1, C2, HWp), lambda b: (b, 0, 0)),
        out_shape=jax.ShapeDtypeStruct((B, C2, HWp), f32),
        compiler_params=pltpu.CompilerParams(
            dimension_semantics=("parallel",),
            vmem_limit_bytes=vmem_limit),
        cost_estimate=cost,
    )(xb, w_stack, b_eq, sid_col)

    # drop the two garbage columns of the padded-width frame -> NCHW output
    return out.reshape(B, C2, H, Wp)[:, :, :, 1:W + 1]


# ---------------------------------------------------------------------------
# Deterministic parameter init (shapes follow the PyTorch module __init__)
# ---------------------------------------------------------------------------
def init_params(key, c1, c2):
    keys = jax.random.split(key, 2)

    def nrm(k, shape, scale=0.2):
        return scale * jax.random.normal(k, shape, jnp.float32)

    def bn_params(c, off=0.0):
        idx = jnp.arange(c, dtype=jnp.float32)
        return (1.0 + 0.05 * idx, 0.02 * idx - 0.03, 0.01 * idx + off, 1.0 + 0.1 * idx)

    p = {}
    p['w3'] = nrm(keys[0], (c2, c1, 3, 3))                 # rbr_dense.conv (no bias)
    p['g3'], p['b3'], p['m3'], p['v3'] = bn_params(c2)     # rbr_dense.bn
    p['w1'] = nrm(keys[1], (c2, c1, 1, 1))                 # rbr_1x1.conv (no bias)
    p['g1'], p['b1'], p['m1'], p['v1'] = bn_params(c2, 0.01)
    p['gid'], p['bid'], p['mid'], p['vid'] = bn_params(c1, 0.02)   # rbr_identity
    return p


# ---------------------------------------------------------------------------
# Pure-JAX (XLA) reference mirroring the PyTorch forward (eval-mode BN)
# ---------------------------------------------------------------------------
def repvgg_block_reference(x, p, eps=1e-5):
    def conv(x, w, pad):
        return lax.conv_general_dilated(
            x, w, (1, 1), [(pad, pad), (pad, pad)],
            dimension_numbers=('NCHW', 'OIHW', 'NCHW'))

    def bn(x, g, b, m, v):
        inv = g / jnp.sqrt(v + eps)
        return ((x - m[None, :, None, None]) * inv[None, :, None, None]
                + b[None, :, None, None])

    dense = bn(conv(x, p['w3'], 1), p['g3'], p['b3'], p['m3'], p['v3'])
    one = bn(conv(x, p['w1'], 0), p['g1'], p['b1'], p['m1'], p['v1'])
    ident = bn(x, p['gid'], p['bid'], p['mid'], p['vid'])
    return jnp.maximum(dense + one + ident, 0.0)           # se = Identity, ReLU


if __name__ == "__main__":
    key = jax.random.PRNGKey(0)
    kx, kp = jax.random.split(key)
    B, C, H, W = 2, 4, 16, 16      # c1 == c2, stride 1 -> identity branch active
    x = jax.random.normal(kx, (B, C, H, W), jnp.float32)
    params = init_params(kp, C, C)

    out = jax.block_until_ready(repvgg_block_pallas(x, params))
    ref = jax.block_until_ready(repvgg_block_reference(x, params))

    assert out.shape == ref.shape == (B, C, H, W)
    # bf16 matmul operands -> bf16-level tolerance against the f32 reference
    if not bool(jnp.allclose(out, ref, atol=3e-2, rtol=3e-2)):
        raise SystemExit(
            f"MISMATCH: max abs err = {float(jnp.max(jnp.abs(out - ref)))}")
    print("KERNEL_OK")
</pallas_src>

<mosaic_0001>
module attributes {stable_mosaic.version = 11 : i64} {
  func.func @_repvgg_kernel(%arg0: i32, %arg1: memref<1x4x326xbf16, #tpu.memory_space<vmem>>, %arg2: memref<9x4x4xbf16, #tpu.memory_space<vmem>>, %arg3: memref<4x1xf32, #tpu.memory_space<vmem>>, %arg4: memref<4x1xf32, #tpu.memory_space<vmem>>, %arg5: memref<1x4x288xf32, #tpu.memory_space<vmem>>) attributes {dimension_semantics = [#tpu.dimension_semantics<parallel>], iteration_bounds = array<i64: 2>, scalar_prefetch = 0 : i64, scratch_operands = 0 : i64, tpu.core_type = #tpu.core_type<tc>, window_params = [{transform_indices = @transform_0, window_bounds = array<i64: 1, 4, 326>}, {pipeline_mode = #tpu.pipeline_mode<synchronous>, transform_indices = @transform_1, window_bounds = array<i64: 9, 4, 4>}, {pipeline_mode = #tpu.pipeline_mode<synchronous>, transform_indices = @transform_2, window_bounds = array<i64: 4, 1>}, {pipeline_mode = #tpu.pipeline_mode<synchronous>, transform_indices = @transform_3, window_bounds = array<i64: 4, 1>}, {transform_indices = @transform_4, window_bounds = array<i64: 1, 4, 288>}]} {
    %c0 = arith.constant 0 : index
    %c0_0 = arith.constant 0 : index
    %c0_1 = arith.constant 0 : index
    %0 = vector.load %arg1[%c0, %c0_0, %c0_1] : memref<1x4x326xbf16, #tpu.memory_space<vmem>>, vector<1x4x326xbf16>
    %1 = vector.shape_cast %0 : vector<1x4x326xbf16> to vector<4x326xbf16>
    %c0_2 = arith.constant 0 : index
    %c0_3 = arith.constant 0 : index
    %c0_4 = arith.constant 0 : index
    %2 = vector.load %arg2[%c0_2, %c0_3, %c0_4] : memref<9x4x4xbf16, #tpu.memory_space<vmem>>, vector<1x4x4xbf16>
    %3 = vector.shape_cast %2 : vector<1x4x4xbf16> to vector<4x4xbf16>
    %4 = vector.extract_strided_slice %1 {offsets = [0, 0], sizes = [4, 288], strides = [1, 1]} : vector<4x326xbf16> to vector<4x288xbf16>
    %cst = arith.constant dense<0.000000e+00> : vector<4x288xf32>
    %5 = tpu.matmul %3, %4, %cst {dimension_numbers = #tpu.dot_dimension_numbers<[1], [0], [0], [1], [0, 0, 1, 1], [], []>} : vector<4x4xbf16>, vector<4x288xbf16>, vector<4x288xf32> -> vector<4x288xf32>
    %c1 = arith.constant 1 : index
    %c0_5 = arith.constant 0 : index
    %c0_6 = arith.constant 0 : index
    %6 = vector.load %arg2[%c1, %c0_5, %c0_6] : memref<9x4x4xbf16, #tpu.memory_space<vmem>>, vector<1x4x4xbf16>
    %7 = vector.shape_cast %6 : vector<1x4x4xbf16> to vector<4x4xbf16>
    %8 = vector.extract_strided_slice %1 {offsets = [0, 1], sizes = [4, 288], strides = [1, 1]} : vector<4x326xbf16> to vector<4x288xbf16>
    %cst_7 = arith.constant dense<0.000000e+00> : vector<4x288xf32>
    %9 = tpu.matmul %7, %8, %cst_7 {dimension_numbers = #tpu.dot_dimension_numbers<[1], [0], [0], [1], [0, 0, 1, 1], [], []>} : vector<4x4xbf16>, vector<4x288xbf16>, vector<4x288xf32> -> vector<4x288xf32>
    %c2 = arith.constant 2 : index
    %c0_8 = arith.constant 0 : index
    %c0_9 = arith.constant 0 : index
    %10 = vector.load %arg2[%c2, %c0_8, %c0_9] : memref<9x4x4xbf16, #tpu.memory_space<vmem>>, vector<1x4x4xbf16>
    %11 = vector.shape_cast %10 : vector<1x4x4xbf16> to vector<4x4xbf16>
    %12 = vector.extract_strided_slice %1 {offsets = [0, 2], sizes = [4, 288], strides = [1, 1]} : vector<4x326xbf16> to vector<4x288xbf16>
    %cst_10 = arith.constant dense<0.000000e+00> : vector<4x288xf32>
    %13 = tpu.matmul %11, %12, %cst_10 {dimension_numbers = #tpu.dot_dimension_numbers<[1], [0], [0], [1], [0, 0, 1, 1], [], []>} : vector<4x4xbf16>, vector<4x288xbf16>, vector<4x288xf32> -> vector<4x288xf32>
    %c3 = arith.constant 3 : index
    %c0_11 = arith.constant 0 : index
    %c0_12 = arith.constant 0 : index
    %14 = vector.load %arg2[%c3, %c0_11, %c0_12] : memref<9x4x4xbf16, #tpu.memory_space<vmem>>, vector<1x4x4xbf16>
    %15 = vector.shape_cast %14 : vector<1x4x4xbf16> to vector<4x4xbf16>
    %16 = vector.extract_strided_slice %1 {offsets = [0, 18], sizes = [4, 288], strides = [1, 1]} : vector<4x326xbf16> to vector<4x288xbf16>
    %cst_13 = arith.constant dense<0.000000e+00> : vector<4x288xf32>
    %17 = tpu.matmul %15, %16, %cst_13 {dimension_numbers = #tpu.dot_dimension_numbers<[1], [0], [0], [1], [0, 0, 1, 1], [], []>} : vector<4x4xbf16>, vector<4x288xbf16>, vector<4x288xf32> -> vector<4x288xf32>
    %c4 = arith.constant 4 : index
    %c0_14 = arith.constant 0 : index
    %c0_15 = arith.constant 0 : index
    %18 = vector.load %arg2[%c4, %c0_14, %c0_15] : memref<9x4x4xbf16, #tpu.memory_space<vmem>>, vector<1x4x4xbf16>
    %19 = vector.shape_cast %18 : vector<1x4x4xbf16> to vector<4x4xbf16>
    %20 = vector.extract_strided_slice %1 {offsets = [0, 19], sizes = [4, 288], strides = [1, 1]} : vector<4x326xbf16> to vector<4x288xbf16>
    %cst_16 = arith.constant dense<0.000000e+00> : vector<4x288xf32>
    %21 = tpu.matmul %19, %20, %cst_16 {dimension_numbers = #tpu.dot_dimension_numbers<[1], [0], [0], [1], [0, 0, 1, 1], [], []>} : vector<4x4xbf16>, vector<4x288xbf16>, vector<4x288xf32> -> vector<4x288xf32>
    %c5 = arith.constant 5 : index
    %c0_17 = arith.constant 0 : index
    %c0_18 = arith.constant 0 : index
    %22 = vector.load %arg2[%c5, %c0_17, %c0_18] : memref<9x4x4xbf16, #tpu.memory_space<vmem>>, vector<1x4x4xbf16>
    %23 = vector.shape_cast %22 : vector<1x4x4xbf16> to vector<4x4xbf16>
    %24 = vector.extract_strided_slice %1 {offsets = [0, 20], sizes = [4, 288], strides = [1, 1]} : vector<4x326xbf16> to vector<4x288xbf16>
    %cst_19 = arith.constant dense<0.000000e+00> : vector<4x288xf32>
    %25 = tpu.matmul %23, %24, %cst_19 {dimension_numbers = #tpu.dot_dimension_numbers<[1], [0], [0], [1], [0, 0, 1, 1], [], []>} : vector<4x4xbf16>, vector<4x288xbf16>, vector<4x288xf32> -> vector<4x288xf32>
    %c6 = arith.constant 6 : index
    %c0_20 = arith.constant 0 : index
    %c0_21 = arith.constant 0 : index
    %26 = vector.load %arg2[%c6, %c0_20, %c0_21] : memref<9x4x4xbf16, #tpu.memory_space<vmem>>, vector<1x4x4xbf16>
    %27 = vector.shape_cast %26 : vector<1x4x4xbf16> to vector<4x4xbf16>
    %28 = vector.extract_strided_slice %1 {offsets = [0, 36], sizes = [4, 288], strides = [1, 1]} : vector<4x326xbf16> to vector<4x288xbf16>
    %cst_22 = arith.constant dense<0.000000e+00> : vector<4x288xf32>
    %29 = tpu.matmul %27, %28, %cst_22 {dimension_numbers = #tpu.dot_dimension_numbers<[1], [0], [0], [1], [0, 0, 1, 1], [], []>} : vector<4x4xbf16>, vector<4x288xbf16>, vector<4x288xf32> -> vector<4x288xf32>
    %c7 = arith.constant 7 : index
    %c0_23 = arith.constant 0 : index
    %c0_24 = arith.constant 0 : index
    %30 = vector.load %arg2[%c7, %c0_23, %c0_24] : memref<9x4x4xbf16, #tpu.memory_space<vmem>>, vector<1x4x4xbf16>
    %31 = vector.shape_cast %30 : vector<1x4x4xbf16> to vector<4x4xbf16>
    %32 = vector.extract_strided_slice %1 {offsets = [0, 37], sizes = [4, 288], strides = [1, 1]} : vector<4x326xbf16> to vector<4x288xbf16>
    %cst_25 = arith.constant dense<0.000000e+00> : vector<4x288xf32>
    %33 = tpu.matmul %31, %32, %cst_25 {dimension_numbers = #tpu.dot_dimension_numbers<[1], [0], [0], [1], [0, 0, 1, 1], [], []>} : vector<4x4xbf16>, vector<4x288xbf16>, vector<4x288xf32> -> vector<4x288xf32>
    %c8 = arith.constant 8 : index
    %c0_26 = arith.constant 0 : index
    %c0_27 = arith.constant 0 : index
    %34 = vector.load %arg2[%c8, %c0_26, %c0_27] : memref<9x4x4xbf16, #tpu.memory_space<vmem>>, vector<1x4x4xbf16>
    %35 = vector.shape_cast %34 : vector<1x4x4xbf16> to vector<4x4xbf16>
    %36 = vector.extract_strided_slice %1 {offsets = [0, 38], sizes = [4, 288], strides = [1, 1]} : vector<4x326xbf16> to vector<4x288xbf16>
    %cst_28 = arith.constant dense<0.000000e+00> : vector<4x288xf32>
    %37 = tpu.matmul %35, %36, %cst_28 {dimension_numbers = #tpu.dot_dimension_numbers<[1], [0], [0], [1], [0, 0, 1, 1], [], []>} : vector<4x4xbf16>, vector<4x288xbf16>, vector<4x288xf32> -> vector<4x288xf32>
    %38 = arith.addf %5, %9 : vector<4x288xf32>
    %39 = arith.addf %13, %17 : vector<4x288xf32>
    %40 = arith.addf %21, %25 : vector<4x288xf32>
    %41 = arith.addf %29, %33 : vector<4x288xf32>
    %42 = arith.addf %38, %39 : vector<4x288xf32>
    %43 = arith.addf %40, %41 : vector<4x288xf32>
    %44 = arith.addf %42, %43 : vector<4x288xf32>
    %45 = arith.addf %44, %37 : vector<4x288xf32>
    %46 = vector.extract_strided_slice %1 {offsets = [0, 19], sizes = [4, 288], strides = [1, 1]} : vector<4x326xbf16> to vector<4x288xbf16>
    %47 = arith.extf %46 : vector<4x288xbf16> to vector<4x288xf32>
    %c0_29 = arith.constant 0 : index
    %c0_30 = arith.constant 0 : index
    %48 = vector.load %arg3[%c0_29, %c0_30] : memref<4x1xf32, #tpu.memory_space<vmem>>, vector<4x1xf32>
    %c0_31 = arith.constant 0 : index
    %c0_32 = arith.constant 0 : index
    %49 = vector.load %arg4[%c0_31, %c0_32] : memref<4x1xf32, #tpu.memory_space<vmem>>, vector<4x1xf32>
    %50 = vector.broadcast %49 : vector<4x1xf32> to vector<4x288xf32>
    %51 = arith.mulf %50, %47 : vector<4x288xf32>
    %52 = vector.broadcast %48 : vector<4x1xf32> to vector<4x288xf32>
    %53 = arith.addf %52, %51 : vector<4x288xf32>
    %54 = arith.addf %45, %53 : vector<4x288xf32>
    %cst_33 = arith.constant 0.000000e+00 : f32
    %55 = vector.broadcast %cst_33 : f32 to vector<4x288xf32>
    %56 = arith.maximumf %54, %55 : vector<4x288xf32>
    %c0_34 = arith.constant 0 : index
    %c0_35 = arith.constant 0 : index
    %c0_36 = arith.constant 0 : index
    %57 = vector.load %arg5[%c0_34, %c0_35, %c0_36] : memref<1x4x288xf32, #tpu.memory_space<vmem>>, vector<1x4x288xf32>
    %58 = vector.shape_cast %57 : vector<1x4x288xf32> to vector<4x288xf32>
    %59 = vector.shape_cast %56 : vector<4x288xf32> to vector<1x4x288xf32>
    tpu.vector_store %arg5[%c0_34, %c0_35, %c0_36], %59 {strides = array<i32>} : memref<1x4x288xf32, #tpu.memory_space<vmem>>, vector<1x4x288xf32>,
    return
  }
  func.func @transform_0(%arg0: i32) -> (i32, i32, i32) {
    %c0_i32 = arith.constant 0 : i32
    %c0_i32_0 = arith.constant 0 : i32
    %c0_i32_1 = arith.constant 0 : i32
    return %arg0, %c0_i32, %c0_i32_0 : i32, i32, i32
  }
  func.func @transform_1(%arg0: i32) -> (i32, i32, i32) {
    %c0_i32 = arith.constant 0 : i32
    %c0_i32_0 = arith.constant 0 : i32
    %c0_i32_1 = arith.constant 0 : i32
    %c0_i32_2 = arith.constant 0 : i32
    return %c0_i32, %c0_i32_0, %c0_i32_1 : i32, i32, i32
  }
  func.func @transform_2(%arg0: i32) -> (i32, i32) {
    %c0_i32 = arith.constant 0 : i32
    %c0_i32_0 = arith.constant 0 : i32
    %c0_i32_1 = arith.constant 0 : i32
    return %c0_i32, %c0_i32_0 : i32, i32
  }
  func.func @transform_3(%arg0: i32) -> (i32, i32) {
    %c0_i32 = arith.constant 0 : i32
    %c0_i32_0 = arith.constant 0 : i32
    %c0_i32_1 = arith.constant 0 : i32
    return %c0_i32, %c0_i32_0 : i32, i32
  }
  func.func @transform_4(%arg0: i32) -> (i32, i32, i32) {
    %c0_i32 = arith.constant 0 : i32
    %c0_i32_0 = arith.constant 0 : i32
    %c0_i32_1 = arith.constant 0 : i32
    return %arg0, %c0_i32, %c0_i32_0 : i32, i32, i32
  }
}

</mosaic_0001>

<llo_original>
// kernel: tpu_custom_call.1
$region0: #{tpu_custom_call.1}
  #allocation0 [shape = 'u32[]', space=smem, size = 0x4, offset = 0x4, fixed_abs, tag = 'smem constant byte address 0x4 - core index']
  #allocation1 [shape = 'u32[144,128]{1,0:T(1,128)}', space=vmem, size = 0x12000, scoped, tag = 'internal scratch']
  %s0 = inlined_call_operand.vmem [shape: bf16[2,4,326], index: 0, kind: input, shape index: {}]
  %s1 = inlined_call_operand.vmem [shape: bf16[9,4,4], index: 1, kind: input, shape index: {}]
  %s2 = inlined_call_operand.vmem [shape: f32[4,1], index: 2, kind: input, shape index: {}]
  %s3 = inlined_call_operand.vmem [shape: f32[4,1], index: 3, kind: input, shape index: {}]
  %s4 = inlined_call_operand.hbm [shape: f32[2,4,288], index: 4, kind: output, shape index: {}]
  %s5 = sld [smem:[#allocation0]]
  $region49: #{tpu_custom_call.1} parent=0
    _
  %s7 = ssub.s32 1, %s5
  %s8 = scalar_select 0, %s7, %s5
  $region1: #{tpu_custom_call.1} parent=0
    #allocation2 [shape = 'u8[12288]{0}', space=vmem, size = 0x3000, scoped, tag = 'output window, operand 0']
    #allocation3 [shape = 's32[2]{0}', space=sflag, size = 0x8, scoped, tag = 'scoped memory for tpu_custom_call.1']
    %9 = vsyncpa [#allocation3], 0
    %s10 = scalar_lea.sflag [#allocation3], 1
    %11 = vsyncpa %s10, 0
    loop: start=0, step=1, limit=4
    $region2: #{tpu_custom_call.1} parent=1 // loop_pre_header
      _
    $region3: #{tpu_custom_call.1} parent=1 // loop_header
      %s13 = sphi 0, %s17
      %p14 = scmp.ge.s32.totalorder %s13, 4
      %s23 = sphi 0, %s25
      %s26 = sphi 0, %s23
      %s27 = sphi 0, %s26
      %s43 = sphi 0, %s27
      %s47 = sphi 0, %s47
      %s49 = sphi 0, %s47
      %s50 = sphi 0, %s49
      %s64 = sphi 0, %s50
      %s68 = sphi 0, %s68
      %s70 = sphi 0, %s68
      %s71 = sphi 0, %s70
      %s85 = sphi 0, %s71
      %s89 = sphi 0, %s89
      %s91 = sphi 0, %s89
      %s92 = sphi 0, %s91
      %s106 = sphi 0, %s92
      %s112 = sphi 0, %s114
      %s115 = sphi 0, %s112
      %s116 = sphi 0, %s115
      %s132 = sphi 0, %s116
    $region4: #{tpu_custom_call.1} parent=1 // loop_header_branch
      %16 = sbr.rel (%p14) target = $region8
    $region5: #{tpu_custom_call.1} parent=1 // loop_body
      %s18 = ssub.s32 %s13, 1
      %s19 = ssub.s32 %s13, 2
      %s20 = sadd.s32 %s13, 1
      %s21 = ssub.s32 %s13, %s20
      %p22 = scmp.eq.s32.totalorder %s21, 0
      %s24 = sadd.s32 %s23, 1
      %s25 = scalar_select %p22, %s23, %s24
      %p28 = pneg %p22
      %p29 = scmp.eq.s32.totalorder %s13, 1
      %p30 = por %p28, %p29
      %p31 = scmp.ne.s32.totalorder %s23, %s26
      %p32 = scmp.eq.s32.totalorder %s13, 0
      %p33 = por %p31, %p32
      %p34 = scmp.ne.s32.totalorder %s23, %s26
      %p35 = scmp.eq.s32.totalorder %s18, 1
      %p36 = por %p34, %p35
      %p37 = scmp.ne.s32.totalorder %s26, %s27
      %p38 = scmp.eq.s32.totalorder %s18, 0
      %p39 = por %p37, %p38
      %p40 = scmp.ne.s32.totalorder %s26, %s27
      %p41 = scmp.eq.s32.totalorder %s19, 1
      %p42 = por %p40, %p41
      %p44 = scmp.ne.s32.totalorder %s27, %s43
      %p45 = scmp.eq.s32.totalorder %s19, 0
      %p46 = por %p44, %p45
      %s48 = sadd.s32 %s47, 1
      %p51 = scmp.eq.s32.totalorder %s13, 1
      %p52 = scmp.ne.s32.totalorder %s47, %s49
      %p53 = scmp.eq.s32.totalorder %s13, 0
      %p54 = por %p52, %p53
      %p55 = scmp.ne.s32.totalorder %s47, %s49
      %p56 = scmp.eq.s32.totalorder %s18, 1
      %p57 = por %p55, %p56
      %p58 = scmp.ne.s32.totalorder %s49, %s50
      %p59 = scmp.eq.s32.totalorder %s18, 0
      %p60 = por %p58, %p59
      %p61 = scmp.ne.s32.totalorder %s49, %s50
      %p62 = scmp.eq.s32.totalorder %s19, 1
      %p63 = por %p61, %p62
      %p65 = scmp.ne.s32.totalorder %s50, %s64
      %p66 = scmp.eq.s32.totalorder %s19, 0
      %p67 = por %p65, %p66
      %s69 = sadd.s32 %s68, 1
      %p72 = scmp.eq.s32.totalorder %s13, 1
      %p73 = scmp.ne.s32.totalorder %s68, %s70
      %p74 = scmp.eq.s32.totalorder %s13, 0
      %p75 = por %p73, %p74
      %p76 = scmp.ne.s32.totalorder %s68, %s70
      %p77 = scmp.eq.s32.totalorder %s18, 1
      %p78 = por %p76, %p77
      %p79 = scmp.ne.s32.totalorder %s70, %s71
      %p80 = scmp.eq.s32.totalorder %s18, 0
      %p81 = por %p79, %p80
      %p82 = scmp.ne.s32.totalorder %s70, %s71
      %p83 = scmp.eq.s32.totalorder %s19, 1
      %p84 = por %p82, %p83
      %p86 = scmp.ne.s32.totalorder %s71, %s85
      %p87 = scmp.eq.s32.totalorder %s19, 0
      %p88 = por %p86, %p87
      %s90 = sadd.s32 %s89, 1
      %p93 = scmp.eq.s32.totalorder %s13, 1
      %p94 = scmp.ne.s32.totalorder %s89, %s91
      %p95 = scmp.eq.s32.totalorder %s13, 0
      %p96 = por %p94, %p95
      %p97 = scmp.ne.s32.totalorder %s89, %s91
      %p98 = scmp.eq.s32.totalorder %s18, 1
      %p99 = por %p97, %p98
      %p100 = scmp.ne.s32.totalorder %s91, %s92
      %p101 = scmp.eq.s32.totalorder %s18, 0
      %p102 = por %p100, %p101
      %p103 = scmp.ne.s32.totalorder %s91, %s92
      %p104 = scmp.eq.s32.totalorder %s19, 1
      %p105 = por %p103, %p104
      %p107 = scmp.ne.s32.totalorder %s92, %s106
      %p108 = scmp.eq.s32.totalorder %s19, 0
      %p109 = por %p107, %p108
      %s110 = ssub.s32 %s13, %s20
      %p111 = scmp.eq.s32.totalorder %s110, 0
      %s113 = sadd.s32 %s112, 1
      %s114 = scalar_select %p111, %s112, %s113
      %p117 = pneg %p111
      %p118 = scmp.eq.s32.totalorder %s13, 1
      %p119 = por %p117, %p118
      %p120 = scmp.ne.s32.totalorder %s112, %s115
      %p121 = scmp.eq.s32.totalorder %s13, 0
      %p122 = por %p120, %p121
      %p123 = scmp.ne.s32.totalorder %s112, %s115
      %p124 = scmp.eq.s32.totalorder %s18, 1
      %p125 = por %p123, %p124
      %p126 = scmp.ne.s32.totalorder %s115, %s116
      %p127 = scmp.eq.s32.totalorder %s18, 0
      %p128 = por %p126, %p127
      %p129 = scmp.ne.s32.totalorder %s115, %s116
      %p130 = scmp.eq.s32.totalorder %s19, 1
      %p131 = por %p129, %p130
      %p133 = scmp.ne.s32.totalorder %s116, %s132
      %p134 = scmp.eq.s32.totalorder %s19, 0
      %p135 = por %p133, %p134
      %p136 = scmp.le.s32.totalorder 1, %s13
      %p137 = scmp.lt.s32.totalorder %s13, 3
      %p138 = pnand %p136, %p137
      %p139 = pneg %p138
      // Predicated region
      $region9: #{tpu_custom_call.1} parent=5 // pred_check
        _
      $region10: #{tpu_custom_call.1} parent=5 // pred_check_branch
        %141 = sbr.rel (%p138) target = $region12
      $region11: #{tpu_custom_call.1} parent=5 // pred_region
        %s142 = ssub.s32 %s13, 1
        // Predicated region
        $region13: #{tpu_custom_call.1} parent=11 // pred_check
          %p143 = pneg %p60
        $region14: #{tpu_custom_call.1} parent=11 // pred_check_branch
          %145 = sbr.rel (%p143) target = $region16
        $region15: #{tpu_custom_call.1} parent=11 // pred_region
          _
        $region16: #{tpu_custom_call.1} parent=11 // pred_fallthru
          _
        // Predicated region
        $region17: #{tpu_custom_call.1} parent=11 // pred_check
          %p146 = pneg %p81
        $region18: #{tpu_custom_call.1} parent=11 // pred_check_branch
          %148 = sbr.rel (%p146) target = $region20
        $region19: #{tpu_custom_call.1} parent=11 // pred_region
          _
        $region20: #{tpu_custom_call.1} parent=11 // pred_fallthru
          _
        // Predicated region
        $region21: #{tpu_custom_call.1} parent=11 // pred_check
          %p149 = pneg %p102
        $region22: #{tpu_custom_call.1} parent=11 // pred_check_branch
          %151 = sbr.rel (%p149) target = $region24
        $region23: #{tpu_custom_call.1} parent=11 // pred_region
          _
        $region24: #{tpu_custom_call.1} parent=11 // pred_fallthru
          _
      $region12: #{tpu_custom_call.1} parent=5 // pred_fallthru
        _
      %p152 = scmp.lt.s32.totalorder %s13, 2
      // Predicated region
      $region25: #{tpu_custom_call.1} parent=5 // pred_check
        %p153 = pneg %p152
      $region26: #{tpu_custom_call.1} parent=5 // pred_check_branch
        %155 = sbr.rel (%p153) target = $region28
      $region27: #{tpu_custom_call.1} parent=5 // pred_region
        // Predicated region
        $region29: #{tpu_custom_call.1} parent=27 // pred_check
          %p156 = pneg %p33
        $region30: #{tpu_custom_call.1} parent=27 // pred_check_branch
          %158 = sbr.rel (%p156) target = $region32
        $region31: #{tpu_custom_call.1} parent=27 // pred_region
          %p159 = scmp.lt.s32.totalorder %s13, 1
          %s160 = scalar_select %p159, %s13, 1
          %s161 = smul.addr %s160, 3
          %s162 = smul.addr %s161, 2
          %s163 = scalar_lea.vmem %s0, %s162
        $region32: #{tpu_custom_call.1} parent=27 // pred_fallthru
          _
      $region28: #{tpu_custom_call.1} parent=5 // pred_fallthru
        _
      %p164 = scmp.le.s32.totalorder 1, %s13
      %p165 = scmp.lt.s32.totalorder %s13, 3
      %p166 = pnand %p164, %p165
      %p167 = pneg %p166
      // Predicated region
      $region33: #{tpu_custom_call.1} parent=5 // pred_check
        _
      $region34: #{tpu_custom_call.1} parent=5 // pred_check_branch
        %169 = sbr.rel (%p166) target = $region36
      $region35: #{tpu_custom_call.1} parent=5 // pred_region
        %s170 = ssub.s32 %s13, 1
        %p171 = scmp.lt.s32.totalorder %s18, 1
        %s172 = scalar_select %p171, %s18, 1
        %s173 = smul.addr %s172, 3
        %s174 = smul.addr %s173, 2
        %s175 = scalar_lea.vmem %s0, %s174
        %p176 = pneg %p39
        %p177 = pneg %p36
        %p178 = pneg %p60
        %p179 = pneg %p57
        %p180 = pneg %p81
        %p181 = pneg %p78
        %p182 = pneg %p102
        %p183 = pneg %p99
        %p184 = pneg %p128
        %p185 = pneg %p125
        %s186 = sand.u32 %s115, 1
        %s187 = scalar_lea.sflag [#allocation3], %s186
        %s188 = sand.u32 %s115, 1
        %s189 = smul.addr %s188, 12
        %s190 = scalar_lea.vmem [#allocation2], %s189
        %p191 = scmp.lt.s32.totalorder %s18, 1
        %s192 = scalar_select %p191, %s18, 1
        %s193 = smul.addr %s192, 3
        %s194 = smul.addr %s193, 2
        %s195 = scalar_lea.vmem %s0, %s194
        %v197 = vld [vmem:[%s195] sm:$0x3f]
        %v198 = vld [vmem:[%s1] sm:$0x3]
        %s199 = scalar_lea.vmem %s1, 2
        %v200 = vld [vmem:[%s199] sm:$0x3]
        %v202 = vcombine.high %v197, %v197
        %v204 = vunpack.c.l.s4 1983009808
        %v205 = vunpack.c.0.s8 %v204
        %v206 = vlaneseq
        %v207 = vshrl.u32 %v206, 7
        %v208 = vsub.s32 %v205, %v207
        %v209 = vrot.slane %v197, %v208
        %v211 = vunpack.c.l.s4 1983009808
        %v212 = vunpack.c.0.s8 %v211
        %v213 = vlaneseq
        %v214 = vshrl.u32 %v213, 7
        %v215 = vsub.s32 %v212, %v214
        %v216 = vrot.slane %v202, %v215
        %v217 = vcombine.high %v209, %v209
        %218 = vrot.lane.b32.xlu0 %v209, 127
        %v219 = vpop.permute.xlu0 %218
        %220 = vrot.lane.b32.xlu0 %v217, 127
        %v221 = vpop.permute.xlu0 %220
        %222 = vrot.lane.b32.xlu0 %v216, 127
        %v223 = vpop.permute.xlu0 %222
        %vm224 = vcmask 1039360
        %v225 = vsel %vm224, %v219, %v221
        %v226 = vsel %vm224, %v221, %v223
        %vm227 = vcmask 31744
        %v229 = vsel %vm227, %v200, 0
        %vm231 = vcmask 1041408
        %v233 = vsel %vm231, %v225, 0
        %v236 = vsel %vm231, %v226, 0
        %v239 = vsel %vm231, %v223, 0
        %241 = vmatprep.subr.bf16.mxu0 0
        %242 = vmatpush1.bf16.msra.mxu0 0
        %243 = vmatprep.subr.bf16.mxu0 0
        %244 = vmatpush1.bf16.msra.mxu0 0
        %245 = vmatprep.subr.bf16.mxu0 0
        %246 = vmatpush1.bf16.msra.mxu0 0
        %247 = vmatprep.subr.bf16.mxu0 0
        %248 = vmatpush1.bf16.msra.mxu0 0
        %249 = vmatprep.subr.bf16.mxu0 0
        %250 = vmatpush1.bf16.msra.mxu0 0
        %251 = vmatprep.subr.bf16.mxu0 0
        %252 = vmatpush1.bf16.msra.mxu0 0
        %253 = vmatprep.subr.bf16.mxu0 0
        %254 = vmatpush1.bf16.msra.mxu0 0
        %255 = vmatprep.subr.bf16.mxu0 %v236
        %256 = vmatpush1.bf16.msra.mxu0 %v233
        %257 = vmatprep.subr.bf16.mxu0 0
        %258 = vmatpush2.bf16.msra.mxu0 0
        %259 = vmatprep.subr.bf16.mxu0 0
        %260 = vmatpush2.bf16.msra.mxu0 0
        %261 = vmatprep.subr.bf16.mxu0 0
        %262 = vmatpush2.bf16.msra.mxu0 0
        %263 = vmatprep.subr.bf16.mxu0 0
        %264 = vmatpush2.bf16.msra.mxu0 0
        %265 = vmatprep.subr.bf16.mxu0 0
        %266 = vmatpush2.bf16.msra.mxu0 0
        %267 = vmatprep.subr.bf16.mxu0 0
        %268 = vmatpush2.bf16.msra.mxu0 0
        %269 = vmatprep.subr.bf16.mxu0 0
        %270 = vmatpush2.bf16.msra.mxu0 0
        %271 = vmatprep.subr.bf16.mxu0 0
        %272 = vmatpush2.bf16.msra.mxu0 0
        %273 = vmatprep.mubr.bf16.mxu0 0
        %274 = vmatmul.mubr.bf16.gmra.mxu0 %v229
        %v275 = vpop.f32.mrf.mxu0
        %v276 = vadd.f32 0.0, %v275
        %v277 = vpop.f32.mrf.mxu0
        %v278 = vadd.f32 0.0, %v277
        %v279 = vpop.f32.mrf.mxu0
        %v280 = vpop.f32.mrf.mxu0
        %281 = vdwg.mxu0
        %282 = vmatprep.subr.bf16.mxu0 0
        %283 = vmatpush1.bf16.msra.mxu0 0
        %284 = vmatprep.subr.bf16.mxu0 0
        %285 = vmatpush1.bf16.msra.mxu0 0
        %286 = vmatprep.subr.bf16.mxu0 0
        %287 = vmatpush1.bf16.msra.mxu0 0
        %288 = vmatprep.subr.bf16.mxu0 0
        %289 = vmatpush1.bf16.msra.mxu0 0
        %290 = vmatprep.subr.bf16.mxu0 0
        %291 = vmatpush1.bf16.msra.mxu0 0
        %292 = vmatprep.subr.bf16.mxu0 0
        %293 = vmatpush1.bf16.msra.mxu0 0
        %294 = vmatprep.subr.bf16.mxu0 0
        %295 = vmatpush1.bf16.msra.mxu0 0
        %296 = vmatprep.subr.bf16.mxu0 0
        %297 = vmatpush1.bf16.msra.mxu0 %v239
        %298 = vmatprep.subr.bf16.mxu0 0
        %299 = vmatpush2.bf16.msra.mxu0 0
        %300 = vmatprep.subr.bf16.mxu0 0
        %301 = vmatpush2.bf16.msra.mxu0 0
        %302 = vmatprep.subr.bf16.mxu0 0
        %303 = vmatpush2.bf16.msra.mxu0 0
        %304 = vmatprep.subr.bf16.mxu0 0
        %305 = vmatpush2.bf16.msra.mxu0 0
        %306 = vmatprep.subr.bf16.mxu0 0
        %307 = vmatpush2.bf16.msra.mxu0 0
        %308 = vmatprep.subr.bf16.mxu0 0
        %309 = vmatpush2.bf16.msra.mxu0 0
        %310 = vmatprep.subr.bf16.mxu0 0
        %311 = vmatpush2.bf16.msra.mxu0 0
        %312 = vmatprep.subr.bf16.mxu0 0
        %313 = vmatpush2.bf16.msra.mxu0 0
        %314 = vmatprep.mubr.bf16.mxu0 0
        %315 = vmatmul.mubr.bf16.gmra.mxu0 %v229
        %v316 = vpop.f32.mrf.mxu0
        %v317 = vadd.f32 0.0, %v316
        %v318 = vpop.f32.mrf.mxu0
        %v319 = vpop.f32.mrf.mxu0
        %v320 = vpop.f32.mrf.mxu0
        %321 = vdwg.mxu0
        %s322 = scalar_lea.vmem %s1, 4
        %v323 = vld [vmem:[%s322] sm:$0x3]
        %s324 = scalar_lea.vmem %s1, 6
        %v325 = vld [vmem:[%s324] sm:$0x3]
        %326 = vrot.lane.b32.xlu0 %v209, 110
        %v327 = vpop.permute.xlu0 %326
        %328 = vrot.lane.b32.xlu0 %v217, 110
        %v329 = vpop.permute.xlu0 %328
        %330 = vrot.lane.b32.xlu0 %v216, 110
        %v331 = vpop.permute.xlu0 %330
        %vm332 = vcmask 900096
        %v333 = vsel %vm332, %v327, %v329
        %v334 = vsel %vm332, %v329, %v331
        %v336 = vsel %vm227, %v325, 0
        %v339 = vsel %vm231, %v333, 0
        %v342 = vsel %vm231, %v334, 0
        %v345 = vsel %vm231, %v331, 0
        %347 = vmatprep.subr.bf16.mxu0 0
        %348 = vmatpush1.bf16.msra.mxu0 0
        %349 = vmatprep.subr.bf16.mxu0 0
        %350 = vmatpush1.bf16.msra.mxu0 0
        %351 = vmatprep.subr.bf16.mxu0 0
        %352 = vmatpush1.bf16.msra.mxu0 0
        %353 = vmatprep.subr.bf16.mxu0 0
        %354 = vmatpush1.bf16.msra.mxu0 0
        %355 = vmatprep.subr.bf16.mxu0 0
        %356 = vmatpush1.bf16.msra.mxu0 0
        %357 = vmatprep.subr.bf16.mxu0 0
        %358 = vmatpush1.bf16.msra.mxu0 0
        %359 = vmatprep.subr.bf16.mxu0 0
        %360 = vmatpush1.bf16.msra.mxu0 0
        %361 = vmatprep.subr.bf16.mxu0 %v342
        %362 = vmatpush1.bf16.msra.mxu0 %v339
        %363 = vmatprep.subr.bf16.mxu0 0
        %364 = vmatpush2.bf16.msra.mxu0 0
        %365 = vmatprep.subr.bf16.mxu0 0
        %366 = vmatpush2.bf16.msra.mxu0 0
        %367 = vmatprep.subr.bf16.mxu0 0
        %368 = vmatpush2.bf16.msra.mxu0 0
        %369 = vmatprep.subr.bf16.mxu0 0
        %370 = vmatpush2.bf16.msra.mxu0 0
        %371 = vmatprep.subr.bf16.mxu0 0
        %372 = vmatpush2.bf16.msra.mxu0 0
        %373 = vmatprep.subr.bf16.mxu0 0
        %374 = vmatpush2.bf16.msra.mxu0 0
        %375 = vmatprep.subr.bf16.mxu0 0
        %376 = vmatpush2.bf16.msra.mxu0 0
        %377 = vmatprep.subr.bf16.mxu0 0
        %378 = vmatpush2.bf16.msra.mxu0 0
        %379 = vmatprep.mubr.bf16.mxu0 0
        %380 = vmatmul.mubr.bf16.gmra.mxu0 %v336
        %v381 = vpop.f32.mrf.mxu0
        %v382 = vadd.f32 0.0, %v381
        %v383 = vpop.f32.mrf.mxu0
        %v384 = vadd.f32 0.0, %v383
        %v385 = vpop.f32.mrf.mxu0
        %v386 = vpop.f32.mrf.mxu0
        %387 = vdwg.mxu0
        %388 = vmatprep.subr.bf16.mxu0 0
        %389 = vmatpush1.bf16.msra.mxu0 0
        %390 = vmatprep.subr.bf16.mxu0 0
        %391 = vmatpush1.bf16.msra.mxu0 0
        %392 = vmatprep.subr.bf16.mxu0 0
        %393 = vmatpush1.bf16.msra.mxu0 0
        %394 = vmatprep.subr.bf16.mxu0 0
        %395 = vmatpush1.bf16.msra.mxu0 0
        %396 = vmatprep.subr.bf16.mxu0 0
        %397 = vmatpush1.bf16.msra.mxu0 0
        %398 = vmatprep.subr.bf16.mxu0 0
        %399 = vmatpush1.bf16.msra.mxu0 0
        %400 = vmatprep.subr.bf16.mxu0 0
        %401 = vmatpush1.bf16.msra.mxu0 0
        %402 = vmatprep.subr.bf16.mxu0 0
        %403 = vmatpush1.bf16.msra.mxu0 %v345
        %404 = vmatprep.subr.bf16.mxu0 0
        %405 = vmatpush2.bf16.msra.mxu0 0
        %406 = vmatprep.subr.bf16.mxu0 0
        %407 = vmatpush2.bf16.msra.mxu0 0
        %408 = vmatprep.subr.bf16.mxu0 0
        %409 = vmatpush2.bf16.msra.mxu0 0
        %410 = vmatprep.subr.bf16.mxu0 0
        %411 = vmatpush2.bf16.msra.mxu0 0
        %412 = vmatprep.subr.bf16.mxu0 0
        %413 = vmatpush2.bf16.msra.mxu0 0
        %414 = vmatprep.subr.bf16.mxu0 0
        %415 = vmatpush2.bf16.msra.mxu0 0
        %416 = vmatprep.subr.bf16.mxu0 0
        %417 = vmatpush2.bf16.msra.mxu0 0
        %418 = vmatprep.subr.bf16.mxu0 0
        %419 = vmatpush2.bf16.msra.mxu0 0
        %420 = vmatprep.mubr.bf16.mxu0 0
        %421 = vmatmul.mubr.bf16.gmra.mxu0 %v336
        %v422 = vpop.f32.mrf.mxu0
        %v423 = vadd.f32 0.0, %v422
        %v424 = vpop.f32.mrf.mxu0
        %v425 = vpop.f32.mrf.mxu0
        %v426 = vpop.f32.mrf.mxu0
        %427 = vdwg.mxu0
        %s428 = scalar_lea.vmem %s1, 8
        %v429 = vld [vmem:[%s428] sm:$0x3]
        %s430 = scalar_lea.vmem %s1, 10
        %v431 = vld [vmem:[%s430] sm:$0x3]
        %432 = vrot.lane.b32.xlu0 %v209, 108
        %v433 = vpop.permute.xlu0 %432
        %434 = vrot.lane.b32.xlu0 %v217, 108
        %v435 = vpop.permute.xlu0 %434
        %436 = vrot.lane.b32.xlu0 %v216, 108
        %v437 = vpop.permute.xlu0 %436
        %vm438 = vcmask 883712
        %v439 = vsel %vm438, %v433, %v435
        %v440 = vsel %vm438, %v435, %v437
        %v442 = vsel %vm227, %v431, 0
        %v445 = vsel %vm231, %v439, 0
        %v448 = vsel %vm231, %v440, 0
        %v451 = vsel %vm231, %v437, 0
        %453 = vmatprep.subr.bf16.mxu0 0
        %454 = vmatpush1.bf16.msra.mxu0 0
        %455 = vmatprep.subr.bf16.mxu0 0
        %456 = vmatpush1.bf16.msra.mxu0 0
        %457 = vmatprep.subr.bf16.mxu0 0
        %458 = vmatpush1.bf16.msra.mxu0 0
        %459 = vmatprep.subr.bf16.mxu0 0
        %460 = vmatpush1.bf16.msra.mxu0 0
        %461 = vmatprep.subr.bf16.mxu0 0
        %462 = vmatpush1.bf16.msra.mxu0 0
        %463 = vmatprep.subr.bf16.mxu0 0
        %464 = vmatpush1.bf16.msra.mxu0 0
        %465 = vmatprep.subr.bf16.mxu0 0
        %466 = vmatpush1.bf16.msra.mxu0 0
        %467 = vmatprep.subr.bf16.mxu0 %v448
        %468 = vmatpush1.bf16.msra.mxu0 %v445
        %469 = vmatprep.subr.bf16.mxu0 0
        %470 = vmatpush2.bf16.msra.mxu0 0
        %471 = vmatprep.subr.bf16.mxu0 0
        %472 = vmatpush2.bf16.msra.mxu0 0
        %473 = vmatprep.subr.bf16.mxu0 0
        %474 = vmatpush2.bf16.msra.mxu0 0
        %475 = vmatprep.subr.bf16.mxu0 0
        %476 = vmatpush2.bf16.msra.mxu0 0
        %477 = vmatprep.subr.bf16.mxu0 0
        %478 = vmatpush2.bf16.msra.mxu0 0
        %479 = vmatprep.subr.bf16.mxu0 0
        %480 = vmatpush2.bf16.msra.mxu0 0
        %481 = vmatprep.subr.bf16.mxu0 0
        %482 = vmatpush2.bf16.msra.mxu0 0
        %483 = vmatprep.subr.bf16.mxu0 0
        %484 = vmatpush2.bf16.msra.mxu0 0
        %485 = vmatprep.mubr.bf16.mxu0 0
        %486 = vmatmul.mubr.bf16.gmra.mxu0 %v442
        %v487 = vpop.f32.mrf.mxu0
        %v488 = vadd.f32 0.0, %v487
        %v489 = vpop.f32.mrf.mxu0
        %v490 = vadd.f32 0.0, %v489
        %v491 = vpop.f32.mrf.mxu0
        %v492 = vpop.f32.mrf.mxu0
        %493 = vdwg.mxu0
        %494 = vmatprep.subr.bf16.mxu0 0
        %495 = vmatpush1.bf16.msra.mxu0 0
        %496 = vmatprep.subr.bf16.mxu0 0
        %497 = vmatpush1.bf16.msra.mxu0 0
        %498 = vmatprep.subr.bf16.mxu0 0
        %499 = vmatpush1.bf16.msra.mxu0 0
        %500 = vmatprep.subr.bf16.mxu0 0
        %501 = vmatpush1.bf16.msra.mxu0 0
        %502 = vmatprep.subr.bf16.mxu0 0
        %503 = vmatpush1.bf16.msra.mxu0 0
        %504 = vmatprep.subr.bf16.mxu0 0
        %505 = vmatpush1.bf16.msra.mxu0 0
        %506 = vmatprep.subr.bf16.mxu0 0
        %507 = vmatpush1.bf16.msra.mxu0 0
        %508 = vmatprep.subr.bf16.mxu0 0
        %509 = vmatpush1.bf16.msra.mxu0 %v451
        %510 = vmatprep.subr.bf16.mxu0 0
        %511 = vmatpush2.bf16.msra.mxu0 0
        %512 = vmatprep.subr.bf16.mxu0 0
        %513 = vmatpush2.bf16.msra.mxu0 0
        %514 = vmatprep.subr.bf16.mxu0 0
        %515 = vmatpush2.bf16.msra.mxu0 0
        %516 = vmatprep.subr.bf16.mxu0 0
        %517 = vmatpush2.bf16.msra.mxu0 0
        %518 = vmatprep.subr.bf16.mxu0 0
        %519 = vmatpush2.bf16.msra.mxu0 0
        %520 = vmatprep.subr.bf16.mxu0 0
        %521 = vmatpush2.bf16.msra.mxu0 0
        %522 = vmatprep.subr.bf16.mxu0 0
        %523 = vmatpush2.bf16.msra.mxu0 0
        %524 = vmatprep.subr.bf16.mxu0 0
        %525 = vmatpush2.bf16.msra.mxu0 0
        %526 = vmatprep.mubr.bf16.mxu0 0
        %527 = vmatmul.mubr.bf16.gmra.mxu0 %v442
        %v528 = vpop.f32.mrf.mxu0
        %v529 = vadd.f32 0.0, %v528
        %v530 = vpop.f32.mrf.mxu0
        %v531 = vpop.f32.mrf.mxu0
        %v532 = vpop.f32.mrf.mxu0
        %533 = vdwg.mxu0
        %s534 = scalar_lea.vmem %s1, 12
        %v535 = vld [vmem:[%s534] sm:$0x3]
        %s536 = scalar_lea.vmem %s1, 14
        %v537 = vld [vmem:[%s536] sm:$0x3]
        %538 = vrot.lane.b32.xlu0 %v209, 91
        %v539 = vpop.permute.xlu0 %538
        %540 = vrot.lane.b32.xlu0 %v217, 91
        %v541 = vpop.permute.xlu0 %540
        %542 = vrot.lane.b32.xlu0 %v216, 91
        %v543 = vpop.permute.xlu0 %542
        %vm544 = vcmask 744448
        %v545 = vsel %vm544, %v539, %v541
        %v546 = vsel %vm544, %v541, %v543
        %v548 = vsel %vm227, %v537, 0
        %v551 = vsel %vm231, %v545, 0
        %v554 = vsel %vm231, %v546, 0
        %v557 = vsel %vm231, %v543, 0
        %559 = vmatprep.subr.bf16.mxu0 0
        %560 = vmatpush1.bf16.msra.mxu0 0
        %561 = vmatprep.subr.bf16.mxu0 0
        %562 = vmatpush1.bf16.msra.mxu0 0
        %563 = vmatprep.subr.bf16.mxu0 0
        %564 = vmatpush1.bf16.msra.mxu0 0
        %565 = vmatprep.subr.bf16.mxu0 0
        %566 = vmatpush1.bf16.msra.mxu0 0
        %567 = vmatprep.subr.bf16.mxu0 0
        %568 = vmatpush1.bf16.msra.mxu0 0
        %569 = vmatprep.subr.bf16.mxu0 0
        %570 = vmatpush1.bf16.msra.mxu0 0
        %571 = vmatprep.subr.bf16.mxu0 0
        %572 = vmatpush1.bf16.msra.mxu0 0
        %573 = vmatprep.subr.bf16.mxu0 %v554
        %574 = vmatpush1.bf16.msra.mxu0 %v551
        %575 = vmatprep.subr.bf16.mxu0 0
        %576 = vmatpush2.bf16.msra.mxu0 0
        %577 = vmatprep.subr.bf16.mxu0 0
        %578 = vmatpush2.bf16.msra.mxu0 0
        %579 = vmatprep.subr.bf16.mxu0 0
        %580 = vmatpush2.bf16.msra.mxu0 0
        %581 = vmatprep.subr.bf16.mxu0 0
        %582 = vmatpush2.bf16.msra.mxu0 0
        %583 = vmatprep.subr.bf16.mxu0 0
        %584 = vmatpush2.bf16.msra.mxu0 0
        %585 = vmatprep.subr.bf16.mxu0 0
        %586 = vmatpush2.bf16.msra.mxu0 0
        %587 = vmatprep.subr.bf16.mxu0 0
        %588 = vmatpush2.bf16.msra.mxu0 0
        %589 = vmatprep.subr.bf16.mxu0 0
        %590 = vmatpush2.bf16.msra.mxu0 0
        %591 = vmatprep.mubr.bf16.mxu0 0
        %592 = vmatmul.mubr.bf16.gmra.mxu0 %v548
        %v593 = vpop.f32.mrf.mxu0
        %v594 = vadd.f32 0.0, %v593
        %v595 = vpop.f32.mrf.mxu0
        %v596 = vadd.f32 0.0, %v595
        %v597 = vpop.f32.mrf.mxu0
        %v598 = vpop.f32.mrf.mxu0
        %599 = vdwg.mxu0
        %600 = vmatprep.subr.bf16.mxu0 0
        %601 = vmatpush1.bf16.msra.mxu0 0
        %602 = vmatprep.subr.bf16.mxu0 0
        %603 = vmatpush1.bf16.msra.mxu0 0
        %604 = vmatprep.subr.bf16.mxu0 0
        %605 = vmatpush1.bf16.msra.mxu0 0
        %606 = vmatprep.subr.bf16.mxu0 0
        %607 = vmatpush1.bf16.msra.mxu0 0
        %608 = vmatprep.subr.bf16.mxu0 0
        %609 = vmatpush1.bf16.msra.mxu0 0
        %610 = vmatprep.subr.bf16.mxu0 0
        %611 = vmatpush1.bf16.msra.mxu0 0
        %612 = vmatprep.subr.bf16.mxu0 0
        %613 = vmatpush1.bf16.msra.mxu0 0
        %614 = vmatprep.subr.bf16.mxu0 0
        %615 = vmatpush1.bf16.msra.mxu0 %v557
        %616 = vmatprep.subr.bf16.mxu0 0
        %617 = vmatpush2.bf16.msra.mxu0 0
        %618 = vmatprep.subr.bf16.mxu0 0
        %619 = vmatpush2.bf16.msra.mxu0 0
        %620 = vmatprep.subr.bf16.mxu0 0
        %621 = vmatpush2.bf16.msra.mxu0 0
        %622 = vmatprep.subr.bf16.mxu0 0
        %623 = vmatpush2.bf16.msra.mxu0 0
        %624 = vmatprep.subr.bf16.mxu0 0
        %625 = vmatpush2.bf16.msra.mxu0 0
        %626 = vmatprep.subr.bf16.mxu0 0
        %627 = vmatpush2.bf16.msra.mxu0 0
        %628 = vmatprep.subr.bf16.mxu0 0
        %629 = vmatpush2.bf16.msra.mxu0 0
        %630 = vmatprep.subr.bf16.mxu0 0
        %631 = vmatpush2.bf16.msra.mxu0 0
        %632 = vmatprep.mubr.bf16.mxu0 0
        %633 = vmatmul.mubr.bf16.gmra.mxu0 %v548
        %v634 = vpop.f32.mrf.mxu0
        %v635 = vadd.f32 0.0, %v634
        %v636 = vpop.f32.mrf.mxu0
        %v637 = vpop.f32.mrf.mxu0
        %v638 = vpop.f32.mrf.mxu0
        %639 = vdwg.mxu0
        %s640 = scalar_lea.vmem %s1, 16
        %v641 = vld [vmem:[%s640] sm:$0x3]
        %642 = vrot.lane.b32.xlu0 %v209, 90
        %v643 = vpop.permute.xlu0 %642
        %644 = vrot.lane.b32.xlu0 %v217, 90
        %v645 = vpop.permute.xlu0 %644
        %646 = vrot.lane.b32.xlu0 %v216, 90
        %v647 = vpop.permute.xlu0 %646
        %vm648 = vcmask 736256
        %v649 = vsel %vm648, %v643, %v645
        %v650 = vsel %vm648, %v645, %v647
        %v652 = vsel %vm227, %v641, 0
        %v655 = vsel %vm231, %v649, 0
        %v658 = vsel %vm231, %v650, 0
        %v661 = vsel %vm231, %v647, 0
        %663 = vmatprep.subr.bf16.mxu0 0
        %664 = vmatpush1.bf16.msra.mxu0 0
        %665 = vmatprep.subr.bf16.mxu0 0
        %666 = vmatpush1.bf16.msra.mxu0 0
        %667 = vmatprep.subr.bf16.mxu0 0
        %668 = vmatpush1.bf16.msra.mxu0 0
        %669 = vmatprep.subr.bf16.mxu0 0
        %670 = vmatpush1.bf16.msra.mxu0 0
        %671 = vmatprep.subr.bf16.mxu0 0
        %672 = vmatpush1.bf16.msra.mxu0 0
        %673 = vmatprep.subr.bf16.mxu0 0
        %674 = vmatpush1.bf16.msra.mxu0 0
        %675 = vmatprep.subr.bf16.mxu0 0
        %676 = vmatpush1.bf16.msra.mxu0 0
        %677 = vmatprep.subr.bf16.mxu0 %v658
        %678 = vmatpush1.bf16.msra.mxu0 %v655
        %679 = vmatprep.subr.bf16.mxu0 0
        %680 = vmatpush2.bf16.msra.mxu0 0
        %681 = vmatprep.subr.bf16.mxu0 0
        %682 = vmatpush2.bf16.msra.mxu0 0
        %683 = vmatprep.subr.bf16.mxu0 0
        %684 = vmatpush2.bf16.msra.mxu0 0
        %685 = vmatprep.subr.bf16.mxu0 0
        %686 = vmatpush2.bf16.msra.mxu0 0
        %687 = vmatprep.subr.bf16.mxu0 0
        %688 = vmatpush2.bf16.msra.mxu0 0
        %689 = vmatprep.subr.bf16.mxu0 0
        %690 = vmatpush2.bf16.msra.mxu0 0
        %691 = vmatprep.subr.bf16.mxu0 0
        %692 = vmatpush2.bf16.msra.mxu0 0
        %693 = vmatprep.subr.bf16.mxu0 0
        %694 = vmatpush2.bf16.msra.mxu0 0
        %695 = vmatprep.mubr.bf16.mxu0 0
        %696 = vmatmul.mubr.bf16.gmra.mxu0 %v652
        %v697 = vpop.f32.mrf.mxu0
        %v698 = vadd.f32 0.0, %v697
        %v699 = vpop.f32.mrf.mxu0
        %v700 = vadd.f32 0.0, %v699
        %v701 = vpop.f32.mrf.mxu0
        %v702 = vpop.f32.mrf.mxu0
        %703 = vdwg.mxu0
        %704 = vmatprep.subr.bf16.mxu0 0
        %705 = vmatpush1.bf16.msra.mxu0 0
        %706 = vmatprep.subr.bf16.mxu0 0
        %707 = vmatpush1.bf16.msra.mxu0 0
        %708 = vmatprep.subr.bf16.mxu0 0
        %709 = vmatpush1.bf16.msra.mxu0 0
        %710 = vmatprep.subr.bf16.mxu0 0
        %711 = vmatpush1.bf16.msra.mxu0 0
        %712 = vmatprep.subr.bf16.mxu0 0
        %713 = vmatpush1.bf16.msra.mxu0 0
        %714 = vmatprep.subr.bf16.mxu0 0
        %715 = vmatpush1.bf16.msra.mxu0 0
        %716 = vmatprep.subr.bf16.mxu0 0
        %717 = vmatpush1.bf16.msra.mxu0 0
        %718 = vmatprep.subr.bf16.mxu0 0
        %719 = vmatpush1.bf16.msra.mxu0 %v661
        %720 = vmatprep.subr.bf16.mxu0 0
        %721 = vmatpush2.bf16.msra.mxu0 0
        %722 = vmatprep.subr.bf16.mxu0 0
        %723 = vmatpush2.bf16.msra.mxu0 0
        %724 = vmatprep.subr.bf16.mxu0 0
        %725 = vmatpush2.bf16.msra.mxu0 0
        %726 = vmatprep.subr.bf16.mxu0 0
        %727 = vmatpush2.bf16.msra.mxu0 0
        %728 = vmatprep.subr.bf16.mxu0 0
        %729 = vmatpush2.bf16.msra.mxu0 0
        %730 = vmatprep.subr.bf16.mxu0 0
        %731 = vmatpush2.bf16.msra.mxu0 0
        %732 = vmatprep.subr.bf16.mxu0 0
        %733 = vmatpush2.bf16.msra.mxu0 0
        %734 = vmatprep.subr.bf16.mxu0 0
        %735 = vmatpush2.bf16.msra.mxu0 0
        %736 = vmatprep.mubr.bf16.mxu0 0
        %737 = vmatmul.mubr.bf16.gmra.mxu0 %v652
        %v738 = vpop.f32.mrf.mxu0
        %v739 = vadd.f32 0.0, %v738
        %v740 = vpop.f32.mrf.mxu0
        %v741 = vpop.f32.mrf.mxu0
        %v742 = vpop.f32.mrf.mxu0
        %743 = vdwg.mxu0
        %v745 = vsel %vm227, %v198, 0
        %v748 = vsel %vm231, %v209, 0
        %v751 = vsel %vm231, %v217, 0
        %v754 = vsel %vm231, %v216, 0
        %756 = vmatprep.subr.bf16.mxu0 0
        %757 = vmatpush1.bf16.msra.mxu0 0
        %758 = vmatprep.subr.bf16.mxu0 0
        %759 = vmatpush1.bf16.msra.mxu0 0
        %760 = vmatprep.subr.bf16.mxu0 0
        %761 = vmatpush1.bf16.msra.mxu0 0
        %762 = vmatprep.subr.bf16.mxu0 0
        %763 = vmatpush1.bf16.msra.mxu0 0
        %764 = vmatprep.subr.bf16.mxu0 0
        %765 = vmatpush1.bf16.msra.mxu0 0
        %766 = vmatprep.subr.bf16.mxu0 0
        %767 = vmatpush1.bf16.msra.mxu0 0
        %768 = vmatprep.subr.bf16.mxu0 0
        %769 = vmatpush1.bf16.msra.mxu0 0
        %770 = vmatprep.subr.bf16.mxu0 %v751
        %771 = vmatpush1.bf16.msra.mxu0 %v748
        %772 = vmatprep.subr.bf16.mxu0 0
        %773 = vmatpush2.bf16.msra.mxu0 0
        %774 = vmatprep.subr.bf16.mxu0 0
        %775 = vmatpush2.bf16.msra.mxu0 0
        %776 = vmatprep.subr.bf16.mxu0 0
        %777 = vmatpush2.bf16.msra.mxu0 0
        %778 = vmatprep.subr.bf16.mxu0 0
        %779 = vmatpush2.bf16.msra.mxu0 0
        %780 = vmatprep.subr.bf16.mxu0 0
        %781 = vmatpush2.bf16.msra.mxu0 0
        %782 = vmatprep.subr.bf16.mxu0 0
        %783 = vmatpush2.bf16.msra.mxu0 0
        %784 = vmatprep.subr.bf16.mxu0 0
        %785 = vmatpush2.bf16.msra.mxu0 0
        %786 = vmatprep.subr.bf16.mxu0 0
        %787 = vmatpush2.bf16.msra.mxu0 0
        %788 = vmatprep.mubr.bf16.mxu0 0
        %789 = vmatmul.mubr.bf16.gmra.mxu0 %v745
        %v790 = vpop.f32.mrf.mxu0
        %v791 = vadd.f32 %v276, %v790
        %v792 = vpop.f32.mrf.mxu0
        %v793 = vadd.f32 %v278, %v792
        %v794 = vpop.f32.mrf.mxu0
        %v795 = vpop.f32.mrf.mxu0
        %796 = vdwg.mxu0
        %797 = vmatprep.subr.bf16.mxu0 0
        %798 = vmatpush1.bf16.msra.mxu0 0
        %799 = vmatprep.subr.bf16.mxu0 0
        %800 = vmatpush1.bf16.msra.mxu0 0
        %801 = vmatprep.subr.bf16.mxu0 0
        %802 = vmatpush1.bf16.msra.mxu0 0
        %803 = vmatprep.subr.bf16.mxu0 0
        %804 = vmatpush1.bf16.msra.mxu0 0
        %805 = vmatprep.subr.bf16.mxu0 0
        %806 = vmatpush1.bf16.msra.mxu0 0
        %807 = vmatprep.subr.bf16.mxu0 0
        %808 = vmatpush1.bf16.msra.mxu0 0
        %809 = vmatprep.subr.bf16.mxu0 0
        %810 = vmatpush1.bf16.msra.mxu0 0
        %811 = vmatprep.subr.bf16.mxu0 0
        %812 = vmatpush1.bf16.msra.mxu0 %v754
        %813 = vmatprep.subr.bf16.mxu0 0
        %814 = vmatpush2.bf16.msra.mxu0 0
        %815 = vmatprep.subr.bf16.mxu0 0
        %816 = vmatpush2.bf16.msra.mxu0 0
        %817 = vmatprep.subr.bf16.mxu0 0
        %818 = vmatpush2.bf16.msra.mxu0 0
        %819 = vmatprep.subr.bf16.mxu0 0
        %820 = vmatpush2.bf16.msra.mxu0 0
        %821 = vmatprep.subr.bf16.mxu0 0
        %822 = vmatpush2.bf16.msra.mxu0 0
        %823 = vmatprep.subr.bf16.mxu0 0
        %824 = vmatpush2.bf16.msra.mxu0 0
        %825 = vmatprep.subr.bf16.mxu0 0
        %826 = vmatpush2.bf16.msra.mxu0 0
        %827 = vmatprep.subr.bf16.mxu0 0
        %828 = vmatpush2.bf16.msra.mxu0 0
        %829 = vmatprep.mubr.bf16.mxu0 0
        %830 = vmatmul.mubr.bf16.gmra.mxu0 %v745
        %v831 = vpop.f32.mrf.mxu0
        %v832 = vadd.f32 %v317, %v831
        %v833 = vpop.f32.mrf.mxu0
        %v834 = vpop.f32.mrf.mxu0
        %v835 = vpop.f32.mrf.mxu0
        %836 = vdwg.mxu0
        %837 = vrot.lane.b32.xlu0 %v209, 126
        %v838 = vpop.permute.xlu0 %837
        %839 = vrot.lane.b32.xlu0 %v217, 126
        %v840 = vpop.permute.xlu0 %839
        %841 = vrot.lane.b32.xlu0 %v216, 126
        %v842 = vpop.permute.xlu0 %841
        %vm843 = vcmask 1031168
        %v844 = vsel %vm843, %v838, %v840
        %v845 = vsel %vm843, %v840, %v842
        %v847 = vsel %vm227, %v323, 0
        %v850 = vsel %vm231, %v844, 0
        %v853 = vsel %vm231, %v845, 0
        %v856 = vsel %vm231, %v842, 0
        %858 = vmatprep.subr.bf16.mxu0 0
        %859 = vmatpush1.bf16.msra.mxu0 0
        %860 = vmatprep.subr.bf16.mxu0 0
        %861 = vmatpush1.bf16.msra.mxu0 0
        %862 = vmatprep.subr.bf16.mxu0 0
        %863 = vmatpush1.bf16.msra.mxu0 0
        %864 = vmatprep.subr.bf16.mxu0 0
        %865 = vmatpush1.bf16.msra.mxu0 0
        %866 = vmatprep.subr.bf16.mxu0 0
        %867 = vmatpush1.bf16.msra.mxu0 0
        %868 = vmatprep.subr.bf16.mxu0 0
        %869 = vmatpush1.bf16.msra.mxu0 0
        %870 = vmatprep.subr.bf16.mxu0 0
        %871 = vmatpush1.bf16.msra.mxu0 0
        %872 = vmatprep.subr.bf16.mxu0 %v853
        %873 = vmatpush1.bf16.msra.mxu0 %v850
        %874 = vmatprep.subr.bf16.mxu0 0
        %875 = vmatpush2.bf16.msra.mxu0 0
        %876 = vmatprep.subr.bf16.mxu0 0
        %877 = vmatpush2.bf16.msra.mxu0 0
        %878 = vmatprep.subr.bf16.mxu0 0
        %879 = vmatpush2.bf16.msra.mxu0 0
        %880 = vmatprep.subr.bf16.mxu0 0
        %881 = vmatpush2.bf16.msra.mxu0 0
        %882 = vmatprep.subr.bf16.mxu0 0
        %883 = vmatpush2.bf16.msra.mxu0 0
        %884 = vmatprep.subr.bf16.mxu0 0
        %885 = vmatpush2.bf16.msra.mxu0 0
        %886 = vmatprep.subr.bf16.mxu0 0
        %887 = vmatpush2.bf16.msra.mxu0 0
        %888 = vmatprep.subr.bf16.mxu0 0
        %889 = vmatpush2.bf16.msra.mxu0 0
        %890 = vmatprep.mubr.bf16.mxu0 0
        %891 = vmatmul.mubr.bf16.gmra.mxu0 %v847
        %v892 = vpop.f32.mrf.mxu0
        %v893 = vadd.f32 %v382, %v892
        %v894 = vpop.f32.mrf.mxu0
        %v895 = vadd.f32 %v384, %v894
        %v896 = vpop.f32.mrf.mxu0
        %v897 = vpop.f32.mrf.mxu0
        %898 = vdwg.mxu0
        %899 = vmatprep.subr.bf16.mxu0 0
        %900 = vmatpush1.bf16.msra.mxu0 0
        %901 = vmatprep.subr.bf16.mxu0 0
        %902 = vmatpush1.bf16.msra.mxu0 0
        %903 = vmatprep.subr.bf16.mxu0 0
        %904 = vmatpush1.bf16.msra.mxu0 0
        %905 = vmatprep.subr.bf16.mxu0 0
        %906 = vmatpush1.bf16.msra.mxu0 0
        %907 = vmatprep.subr.bf16.mxu0 0
        %908 = vmatpush1.bf16.msra.mxu0 0
        %909 = vmatprep.subr.bf16.mxu0 0
        %910 = vmatpush1.bf16.msra.mxu0 0
        %911 = vmatprep.subr.bf16.mxu0 0
        %912 = vmatpush1.bf16.msra.mxu0 0
        %913 = vmatprep.subr.bf16.mxu0 0
        %914 = vmatpush1.bf16.msra.mxu0 %v856
        %915 = vmatprep.subr.bf16.mxu0 0
        %916 = vmatpush2.bf16.msra.mxu0 0
        %917 = vmatprep.subr.bf16.mxu0 0
        %918 = vmatpush2.bf16.msra.mxu0 0
        %919 = vmatprep.subr.bf16.mxu0 0
        %920 = vmatpush2.bf16.msra.mxu0 0
        %921 = vmatprep.subr.bf16.mxu0 0
        %922 = vmatpush2.bf16.msra.mxu0 0
        %923 = vmatprep.subr.bf16.mxu0 0
        %924 = vmatpush2.bf16.msra.mxu0 0
        %925 = vmatprep.subr.bf16.mxu0 0
        %926 = vmatpush2.bf16.msra.mxu0 0
        %927 = vmatprep.subr.bf16.mxu0 0
        %928 = vmatpush2.bf16.msra.mxu0 0
        %929 = vmatprep.subr.bf16.mxu0 0
        %930 = vmatpush2.bf16.msra.mxu0 0
        %931 = vmatprep.mubr.bf16.mxu0 0
        %932 = vmatmul.mubr.bf16.gmra.mxu0 %v847
        %v933 = vpop.f32.mrf.mxu0
        %v934 = vadd.f32 %v423, %v933
        %v935 = vpop.f32.mrf.mxu0
        %v936 = vpop.f32.mrf.mxu0
        %v937 = vpop.f32.mrf.mxu0
        %938 = vdwg.mxu0
        %939 = vrot.lane.b32.xlu0 %v209, 109
        %v940 = vpop.permute.xlu0 %939
        %941 = vrot.lane.b32.xlu0 %v217, 109
        %v942 = vpop.permute.xlu0 %941
        %943 = vrot.lane.b32.xlu0 %v216, 109
        %v944 = vpop.permute.xlu0 %943
        %vm945 = vcmask 891904
        %v946 = vsel %vm945, %v940, %v942
        %v947 = vsel %vm945, %v942, %v944
        %v949 = vsel %vm227, %v429, 0
        %v952 = vsel %vm231, %v946, 0
        %v955 = vsel %vm231, %v947, 0
        %v958 = vsel %vm231, %v944, 0
        %960 = vmatprep.subr.bf16.mxu0 0
        %961 = vmatpush1.bf16.msra.mxu0 0
        %962 = vmatprep.subr.bf16.mxu0 0
        %963 = vmatpush1.bf16.msra.mxu0 0
        %964 = vmatprep.subr.bf16.mxu0 0
        %965 = vmatpush1.bf16.msra.mxu0 0
        %966 = vmatprep.subr.bf16.mxu0 0
        %967 = vmatpush1.bf16.msra.mxu0 0
        %968 = vmatprep.subr.bf16.mxu0 0
        %969 = vmatpush1.bf16.msra.mxu0 0
        %970 = vmatprep.subr.bf16.mxu0 0
        %971 = vmatpush1.bf16.msra.mxu0 0
        %972 = vmatprep.subr.bf16.mxu0 0
        %973 = vmatpush1.bf16.msra.mxu0 0
        %974 = vmatprep.subr.bf16.mxu0 %v955
        %975 = vmatpush1.bf16.msra.mxu0 %v952
        %976 = vmatprep.subr.bf16.mxu0 0
        %977 = vmatpush2.bf16.msra.mxu0 0
        %978 = vmatprep.subr.bf16.mxu0 0
        %979 = vmatpush2.bf16.msra.mxu0 0
        %980 = vmatprep.subr.bf16.mxu0 0
        %981 = vmatpush2.bf16.msra.mxu0 0
        %982 = vmatprep.subr.bf16.mxu0 0
        %983 = vmatpush2.bf16.msra.mxu0 0
        %984 = vmatprep.subr.bf16.mxu0 0
        %985 = vmatpush2.bf16.msra.mxu0 0
        %986 = vmatprep.subr.bf16.mxu0 0
        %987 = vmatpush2.bf16.msra.mxu0 0
        %988 = vmatprep.subr.bf16.mxu0 0
        %989 = vmatpush2.bf16.msra.mxu0 0
        %990 = vmatprep.subr.bf16.mxu0 0
        %991 = vmatpush2.bf16.msra.mxu0 0
        %992 = vmatprep.mubr.bf16.mxu0 0
        %993 = vmatmul.mubr.bf16.gmra.mxu0 %v949
        %v994 = vpop.f32.mrf.mxu0
        %v995 = vadd.f32 %v488, %v994
        %v996 = vpop.f32.mrf.mxu0
        %v997 = vadd.f32 %v490, %v996
        %v998 = vpop.f32.mrf.mxu0
        %v999 = vpop.f32.mrf.mxu0
        %1000 = vdwg.mxu0
        %1001 = vmatprep.subr.bf16.mxu0 0
        %1002 = vmatpush1.bf16.msra.mxu0 0
        %1003 = vmatprep.subr.bf16.mxu0 0
        %1004 = vmatpush1.bf16.msra.mxu0 0
        %1005 = vmatprep.subr.bf16.mxu0 0
        %1006 = vmatpush1.bf16.msra.mxu0 0
        %1007 = vmatprep.subr.bf16.mxu0 0
        %1008 = vmatpush1.bf16.msra.mxu0 0
        %1009 = vmatprep.subr.bf16.mxu0 0
        %1010 = vmatpush1.bf16.msra.mxu0 0
        %1011 = vmatprep.subr.bf16.mxu0 0
        %1012 = vmatpush1.bf16.msra.mxu0 0
        %1013 = vmatprep.subr.bf16.mxu0 0
        %1014 = vmatpush1.bf16.msra.mxu0 0
        %1015 = vmatprep.subr.bf16.mxu0 0
        %1016 = vmatpush1.bf16.msra.mxu0 %v958
        %1017 = vmatprep.subr.bf16.mxu0 0
        %1018 = vmatpush2.bf16.msra.mxu0 0
        %1019 = vmatprep.subr.bf16.mxu0 0
        %1020 = vmatpush2.bf16.msra.mxu0 0
        %1021 = vmatprep.subr.bf16.mxu0 0
        %1022 = vmatpush2.bf16.msra.mxu0 0
        %1023 = vmatprep.subr.bf16.mxu0 0
        %1024 = vmatpush2.bf16.msra.mxu0 0
        %1025 = vmatprep.subr.bf16.mxu0 0
        %1026 = vmatpush2.bf16.msra.mxu0 0
        %1027 = vmatprep.subr.bf16.mxu0 0
        %1028 = vmatpush2.bf16.msra.mxu0 0
        %1029 = vmatprep.subr.bf16.mxu0 0
        %1030 = vmatpush2.bf16.msra.mxu0 0
        %1031 = vmatprep.subr.bf16.mxu0 0
        %1032 = vmatpush2.bf16.msra.mxu0 0
        %1033 = vmatprep.mubr.bf16.mxu0 0
        %1034 = vmatmul.mubr.bf16.gmra.mxu0 %v949
        %v1035 = vpop.f32.mrf.mxu0
        %v1036 = vadd.f32 %v529, %v1035
        %v1037 = vpop.f32.mrf.mxu0
        %v1038 = vpop.f32.mrf.mxu0
        %v1039 = vpop.f32.mrf.mxu0
        %1040 = vdwg.mxu0
        %1041 = vrot.lane.b32.xlu0 %v209, 92
        %v1042 = vpop.permute.xlu0 %1041
        %1043 = vrot.lane.b32.xlu0 %v217, 92
        %v1044 = vpop.permute.xlu0 %1043
        %1045 = vrot.lane.b32.xlu0 %v216, 92
        %v1046 = vpop.permute.xlu0 %1045
        %vm1047 = vcmask 752640
        %v1048 = vsel %vm1047, %v1042, %v1044
        %v1049 = vsel %vm1047, %v1044, %v1046
        %v1051 = vsel %vm227, %v535, 0
        %v1054 = vsel %vm231, %v1048, 0
        %v1057 = vsel %vm231, %v1049, 0
        %v1060 = vsel %vm231, %v1046, 0
        %1062 = vmatprep.subr.bf16.mxu0 0
        %1063 = vmatpush1.bf16.msra.mxu0 0
        %1064 = vmatprep.subr.bf16.mxu0 0
        %1065 = vmatpush1.bf16.msra.mxu0 0
        %1066 = vmatprep.subr.bf16.mxu0 0
        %1067 = vmatpush1.bf16.msra.mxu0 0
        %1068 = vmatprep.subr.bf16.mxu0 0
        %1069 = vmatpush1.bf16.msra.mxu0 0
        %1070 = vmatprep.subr.bf16.mxu0 0
        %1071 = vmatpush1.bf16.msra.mxu0 0
        %1072 = vmatprep.subr.bf16.mxu0 0
        %1073 = vmatpush1.bf16.msra.mxu0 0
        %1074 = vmatprep.subr.bf16.mxu0 0
        %1075 = vmatpush1.bf16.msra.mxu0 0
        %1076 = vmatprep.subr.bf16.mxu0 %v1057
        %1077 = vmatpush1.bf16.msra.mxu0 %v1054
        %1078 = vmatprep.subr.bf16.mxu0 0
        %1079 = vmatpush2.bf16.msra.mxu0 0
        %1080 = vmatprep.subr.bf16.mxu0 0
        %1081 = vmatpush2.bf16.msra.mxu0 0
        %1082 = vmatprep.subr.bf16.mxu0 0
        %1083 = vmatpush2.bf16.msra.mxu0 0
        %1084 = vmatprep.subr.bf16.mxu0 0
        %1085 = vmatpush2.bf16.msra.mxu0 0
        %1086 = vmatprep.subr.bf16.mxu0 0
        %1087 = vmatpush2.bf16.msra.mxu0 0
        %1088 = vmatprep.subr.bf16.mxu0 0
        %1089 = vmatpush2.bf16.msra.mxu0 0
        %1090 = vmatprep.subr.bf16.mxu0 0
        %1091 = vmatpush2.bf16.msra.mxu0 0
        %1092 = vmatprep.subr.bf16.mxu0 0
        %1093 = vmatpush2.bf16.msra.mxu0 0
        %1094 = vmatprep.mubr.bf16.mxu0 0
        %1095 = vmatmul.mubr.bf16.gmra.mxu0 %v1051
        %v1096 = vpop.f32.mrf.mxu0
        %v1097 = vadd.f32 %v594, %v1096
        %v1098 = vpop.f32.mrf.mxu0
        %v1099 = vadd.f32 %v596, %v1098
        %v1100 = vpop.f32.mrf.mxu0
        %v1101 = vpop.f32.mrf.mxu0
        %1102 = vdwg.mxu0
        %1103 = vmatprep.subr.bf16.mxu0 0
        %1104 = vmatpush1.bf16.msra.mxu0 0
        %1105 = vmatprep.subr.bf16.mxu0 0
        %1106 = vmatpush1.bf16.msra.mxu0 0
        %1107 = vmatprep.subr.bf16.mxu0 0
        %1108 = vmatpush1.bf16.msra.mxu0 0
        %1109 = vmatprep.subr.bf16.mxu0 0
        %1110 = vmatpush1.bf16.msra.mxu0 0
        %1111 = vmatprep.subr.bf16.mxu0 0
        %1112 = vmatpush1.bf16.msra.mxu0 0
        %1113 = vmatprep.subr.bf16.mxu0 0
        %1114 = vmatpush1.bf16.msra.mxu0 0
        %1115 = vmatprep.subr.bf16.mxu0 0
        %1116 = vmatpush1.bf16.msra.mxu0 0
        %1117 = vmatprep.subr.bf16.mxu0 0
        %1118 = vmatpush1.bf16.msra.mxu0 %v1060
        %1119 = vmatprep.subr.bf16.mxu0 0
        %1120 = vmatpush2.bf16.msra.mxu0 0
        %1121 = vmatprep.subr.bf16.mxu0 0
        %1122 = vmatpush2.bf16.msra.mxu0 0
        %1123 = vmatprep.subr.bf16.mxu0 0
        %1124 = vmatpush2.bf16.msra.mxu0 0
        %1125 = vmatprep.subr.bf16.mxu0 0
        %1126 = vmatpush2.bf16.msra.mxu0 0
        %1127 = vmatprep.subr.bf16.mxu0 0
        %1128 = vmatpush2.bf16.msra.mxu0 0
        %1129 = vmatprep.subr.bf16.mxu0 0
        %1130 = vmatpush2.bf16.msra.mxu0 0
        %1131 = vmatprep.subr.bf16.mxu0 0
        %1132 = vmatpush2.bf16.msra.mxu0 0
        %1133 = vmatprep.subr.bf16.mxu0 0
        %1134 = vmatpush2.bf16.msra.mxu0 0
        %1135 = vmatprep.mubr.bf16.mxu0 0
        %1136 = vmatmul.mubr.bf16.gmra.mxu0 %v1051
        %v1137 = vpop.f32.mrf.mxu0
        %v1138 = vadd.f32 %v635, %v1137
        %v1139 = vpop.f32.mrf.mxu0
        %v1140 = vpop.f32.mrf.mxu0
        %v1141 = vpop.f32.mrf.mxu0
        %1142 = vdwg.mxu0
        %v1143 = vadd.f32 %v791, %v893
        %v1144 = vadd.f32 %v793, %v895
        %v1145 = vadd.f32 %v832, %v934
        %v1146 = vadd.f32 %v995, %v1097
        %v1147 = vadd.f32 %v997, %v1099
        %v1148 = vadd.f32 %v1036, %v1138
        %v1149 = vadd.f32 %v1143, %v1146
        %v1150 = vadd.f32 %v1144, %v1147
        %v1151 = vadd.f32 %v1145, %v1148
        %v1152 = vadd.f32 %v1149, %v698
        %v1153 = vadd.f32 %v1150, %v700
        %v1154 = vadd.f32 %v1151, %v739
        %v1155 = vunpack.c.l.bf16 %v197
        %v1156 = vunpack.c.h.bf16 %v197
        %v1157 = vld [vmem:[%s2] sm:$0xf]
        %v1158 = vld [vmem:[%s3] sm:$0xf]
        %1160 = vset.pattern.permute.xlu0 0
        %1161 = vperm.xlu0 %1160, %v1158
        %v1162 = vpop.permute.xlu0 %1161
        %v1166 = vcombine.high %v1155, %v1155
        %1167 = vrot.lane.b32.xlu0 %v1155, 109
        %v1168 = vpop.permute.xlu0 %1167
        %1169 = vrot.lane.b32.xlu0 %v1166, 109
        %v1170 = vpop.permute.xlu0 %1169
        %1171 = vrot.lane.b32.xlu0 %v1156, 109
        %v1172 = vpop.permute.xlu0 %1171
        %vm1173 = vcmask 891904
        %v1174 = vsel %vm1173, %v1168, %v1170
        %v1175 = vsel %vm1173, %v1170, %v1172
        %v1179 = vmul.f32 %v1162, %v1174
        %v1180 = vmul.f32 %v1162, %v1175
        %v1181 = vmul.f32 %v1162, %v1172
        %1183 = vset.pattern.permute.xlu0 0
        %1184 = vperm.xlu0 %1183, %v1157
        %v1185 = vpop.permute.xlu0 %1184
        %v1187 = vadd.f32 %v1185, %v1179
        %v1188 = vadd.f32 %v1185, %v1180
        %v1189 = vadd.f32 %v1185, %v1181
        %v1190 = vadd.f32 %v1152, %v1187
        %v1191 = vadd.f32 %v1153, %v1188
        %v1192 = vadd.f32 %v1154, %v1189
        %v1193 = vmax.f32 %v1190, 0.0
        %v1194 = vmax.f32 %v1191, 0.0
        %v1195 = vmax.f32 %v1192, 0.0
        %v1198 = vcombine.low %v1193, %v1194
        %1200 = vst [vmem:[%s190] sm:$0xff] %v1198
        %vm1201 = vcmask 257024
        %1202 = vst.msk [vmem:[%s190 + $0x8] sm:$0xf] %vm1201, %v1195
        %s1203 = sand.u32 %s115, 1
        %s1204 = scalar_lea.sflag [#allocation3], %s1203
        %s1205 = sand.u32 %s115, 1
        %s1206 = smul.addr %s1205, 12
        %s1207 = scalar_lea.vmem [#allocation2], %s1206
        // Predicated region
        $region37: #{tpu_custom_call.1} parent=35 // pred_check
          %p1208 = pneg %p125
        $region38: #{tpu_custom_call.1} parent=35 // pred_check_branch
          %1210 = sbr.rel (%p1208) target = $region40
        $region39: #{tpu_custom_call.1} parent=35 // pred_region
          %s1212 = ssub.s32 192, 192
          %1213 = vsyncadd %s1204, %s1212
          %s1214 = smul.addr %s18, 3
          %s1215 = smul.addr %s1214, 64
          %s1216 = scalar_lea.hbm %s4, %s1215
          %s1218 = sshll.u32 %s1207, 4
          %s1219 = int_to_ptr.vmem [resolvable:$true] %s1218
          %1221 = dma.vmem_to_hbm [thread:$0]  %s1219, 192, %s1216, %s1204
        $region40: #{tpu_custom_call.1} parent=35 // pred_fallthru
          _
      $region36: #{tpu_custom_call.1} parent=5 // pred_fallthru
        _
      %p1222 = scmp.le.s32.totalorder 2, %s13
      // Predicated region
      $region41: #{tpu_custom_call.1} parent=5 // pred_check
        %p1223 = pneg %p1222
      $region42: #{tpu_custom_call.1} parent=5 // pred_check_branch
        %1225 = sbr.rel (%p1223) target = $region44
      $region43: #{tpu_custom_call.1} parent=5 // pred_region
        %s1226 = ssub.s32 %s13, 2
        // Predicated region
        $region45: #{tpu_custom_call.1} parent=43 // pred_check
          %p1227 = pneg %p131
        $region46: #{tpu_custom_call.1} parent=43 // pred_check_branch
          %1229 = sbr.rel (%p1227) target = $region48
        $region47: #{tpu_custom_call.1} parent=43 // pred_region
          %s1230 = sand.u32 %s116, 1
          %s1231 = scalar_lea.sflag [#allocation3], %s1230
          %s1232 = sand.u32 %s116, 1
          %s1233 = smul.addr %s1232, 12
          %s1234 = scalar_lea.vmem [#allocation2], %s1233
          %1235 = dma.done %s1231, 192
        $region48: #{tpu_custom_call.1} parent=43 // pred_fallthru
          _
      $region44: #{tpu_custom_call.1} parent=5 // pred_fallthru
        _
    $region6: #{tpu_custom_call.1} parent=1 // loop_footer
      %s17 = sadd.s32 1, %s13
    $region7: #{tpu_custom_call.1} parent=1 // loop_footer_branch
      %12 = sbr.rel target = $region3
    $region8: #{tpu_custom_call.1} parent=1 // loop_exit
      _
    %1236 = vsyncpa [#allocation3], 1
    %s1237 = scalar_lea.sflag [#allocation3], 1
    %1238 = vsyncpa %s1237, 1

</llo_original>
